<compile_context>
chip_gen: v5e
topology: v5e:2x2
jax: 0.10.0
libtpu: 0.0.40
codegen_flags: <defaults>
</compile_context>

<pallas_src>
import jax
import jax.numpy as jnp
from jax.experimental import pallas as pl
from jax.experimental.pallas import tpu as pltpu


def _logreg_kernel(x_ref, w_ref, b_ref, o_ref):
    # x_ref: (TB, D) VMEM, w_ref: (1, D) VMEM, b_ref: (1, 1) SMEM,
    # o_ref: (1, TB) VMEM (lane-dense output row).
    z = jax.lax.dot_general(
        w_ref[...], x_ref[...],
        dimension_numbers=(((1,), (1,)), ((), ())),   # contract D of both -> (1, TB)
        preferred_element_type=jnp.float32,
    )
    z = z + b_ref[0, 0]                               # hoisted scalar bias add
    o_ref[...] = jax.nn.sigmoid(z).astype(o_ref.dtype)


def _round_up(x, m):
    return ((x + m - 1) // m) * m


def _pick_batch_tile(batch, input_dim, target_bytes=4 << 20):
    """Largest lane-aligned batch tile whose *padded* x block is ~target_bytes.

    Mosaic pads the lane (last) dim of the (tb, D) x block to 128, so the real
    VMEM footprint is tb * round_up(D, 128) * 4 bytes (x2 for double-buffering).
    4 MiB padded -> 8 MiB double-buffered, inside v5e's 16 MiB scoped default.
    """
    d_padded = _round_up(max(int(input_dim), 1), 128)
    rows = max(128, (target_bytes // (d_padded * 4)) // 128 * 128)
    if batch >= 512:
        # Keep grid >= 2 so dimension_semantics=("parallel",) can shard the
        # batch axis across both v7x TensorCores.
        rows = min(rows, _round_up(pl.cdiv(batch, 2), 128))
    return int(min(batch, rows))


def logistic_regression_forward(x, weight, bias, *, batch_tile=None):
    """sigmoid(x @ weight.T + bias)  ==  torch.sigmoid(nn.Linear(D, 1)(x)).

    x: (B, D) f32, weight: (1, D) f32 (torch nn.Linear layout), bias: (1,) f32.
    Returns (B, 1) f32.
    """
    B, D = x.shape
    tb = batch_tile if batch_tile is not None else _pick_batch_tile(B, D)
    grid = (pl.cdiv(B, tb),)

    b = bias.reshape(1, 1).astype(jnp.float32)  # scalar lives in SMEM

    out_row = pl.pallas_call(
        _logreg_kernel,
        out_shape=jax.ShapeDtypeStruct((1, B), x.dtype),
        grid_spec=pl.GridSpec(
            grid=grid,
            in_specs=[
                # x streamed block-by-block; double-buffered by the pipeline.
                pl.BlockSpec((tb, D), lambda i: (i, 0)),
                # weight kept (1, D): lane-dense, reused every grid step.
                pl.BlockSpec((1, D), lambda i: (0, 0)),
                # bias scalar in SMEM.
                pl.BlockSpec(memory_space=pltpu.SMEM),
            ],
            # Lane-dense (1, tb) output block -> unmasked full-vreg stores.
            out_specs=pl.BlockSpec((1, tb), lambda i: (0, i)),
        ),
        compiler_params=pltpu.CompilerParams(
            # Batch axis is embarrassingly parallel -> megacore sharding on v7x.
            dimension_semantics=("parallel",),
        ),
    )(x, weight, b)

    # (1, B) -> (B, 1): same memory order, free wrapper-side reshape.
    return out_row.reshape(B, 1)


if __name__ == "__main__":
    key = jax.random.PRNGKey(0)
    k_x, k_w, k_b = jax.random.split(key, 3)

    # Small shapes consistent with nn.Linear(input_dim, 1).
    batch, input_dim = 8, 32
    x = jax.random.normal(k_x, (batch, input_dim), dtype=jnp.float32)
    weight = jax.random.normal(k_w, (1, input_dim), dtype=jnp.float32) * 0.1
    bias = jax.random.normal(k_b, (1,), dtype=jnp.float32) * 0.1

    out = jax.block_until_ready(logistic_regression_forward(x, weight, bias))
    ref = jax.nn.sigmoid(x @ weight.T + bias)
    assert out.shape == (batch, 1)
    assert jnp.allclose(out, ref, atol=1e-5), "mismatch vs reference (small)"

    # Multi-block pipelined path with an explicit lane-aligned tile (grid = 4).
    batch2 = 2048
    x2 = jax.random.normal(k_x, (batch2, input_dim), dtype=jnp.float32)
    out2 = jax.block_until_ready(
        logistic_regression_forward(x2, weight, bias, batch_tile=512))
    ref2 = jax.nn.sigmoid(x2 @ weight.T + bias)
    assert out2.shape == (batch2, 1)
    assert jnp.allclose(out2, ref2, atol=1e-5), "mismatch vs reference (tiled)"

    # Default tile selection path (grid >= 2 for large B).
    out3 = jax.block_until_ready(logistic_regression_forward(x2, weight, bias))
    assert out3.shape == (batch2, 1)
    assert jnp.allclose(out3, ref2, atol=1e-5), "mismatch vs reference (auto tile)"

    print("KERNEL_OK")
</pallas_src>

<mosaic_0001>
module attributes {stable_mosaic.version = 11 : i64} {
  func.func @_logreg_kernel(%arg0: i32, %arg1: memref<8x32xf32, #tpu.memory_space<vmem>>, %arg2: memref<1x32xf32, #tpu.memory_space<vmem>>, %arg3: memref<1x1xf32, #tpu.memory_space<smem>>, %arg4: memref<1x8xf32, #tpu.memory_space<vmem>>) attributes {dimension_semantics = [#tpu.dimension_semantics<parallel>], iteration_bounds = array<i64: 1>, scalar_prefetch = 0 : i64, scratch_operands = 0 : i64, tpu.core_type = #tpu.core_type<tc>, window_params = [{transform_indices = @transform_0, window_bounds = array<i64: 8, 32>}, {pipeline_mode = #tpu.pipeline_mode<synchronous>, transform_indices = @transform_1, window_bounds = array<i64: 1, 32>}, {transform_indices = @transform_2, window_bounds = array<i64: 1, 1>}, {transform_indices = @transform_3, window_bounds = array<i64: 1, 8>}]} {
    %c0 = arith.constant 0 : index
    %c0_0 = arith.constant 0 : index
    %0 = vector.load %arg2[%c0, %c0_0] : memref<1x32xf32, #tpu.memory_space<vmem>>, vector<1x32xf32>
    %c0_1 = arith.constant 0 : index
    %c0_2 = arith.constant 0 : index
    %1 = vector.load %arg1[%c0_1, %c0_2] : memref<8x32xf32, #tpu.memory_space<vmem>>, vector<8x32xf32>
    %cst = arith.constant dense<0.000000e+00> : vector<1x8xf32>
    %2 = tpu.matmul %0, %1, %cst {dimension_numbers = #tpu.dot_dimension_numbers<[1], [1], [0], [0], [0, 0, 1, 0], [], []>} : vector<1x32xf32>, vector<8x32xf32>, vector<1x8xf32> -> vector<1x8xf32>
    %c0_3 = arith.constant 0 : index
    %c0_4 = arith.constant 0 : index
    %3 = memref.load %arg3[%c0_3, %c0_4] : memref<1x1xf32, #tpu.memory_space<smem>>
    %4 = vector.broadcast %3 : f32 to vector<1x8xf32>
    %5 = arith.addf %2, %4 : vector<1x8xf32>
    %6 = arith.negf %5 : vector<1x8xf32>
    %7 = math.exp %6 : vector<1x8xf32>
    %cst_5 = arith.constant 1.000000e+00 : f32
    %8 = vector.broadcast %cst_5 : f32 to vector<1x8xf32>
    %9 = arith.addf %8, %7 : vector<1x8xf32>
    %10 = arith.divf %8, %9 : vector<1x8xf32>
    %c0_6 = arith.constant 0 : index
    %c0_7 = arith.constant 0 : index
    %11 = vector.load %arg4[%c0_6, %c0_7] : memref<1x8xf32, #tpu.memory_space<vmem>>, vector<1x8xf32>
    tpu.vector_store %arg4[%c0_6, %c0_7], %10 {strides = array<i32>} : memref<1x8xf32, #tpu.memory_space<vmem>>, vector<1x8xf32>,
    return
  }
  func.func @transform_0(%arg0: i32) -> (i32, i32) {
    %c0_i32 = arith.constant 0 : i32
    %c0_i32_0 = arith.constant 0 : i32
    return %arg0, %c0_i32 : i32, i32
  }
  func.func @transform_1(%arg0: i32) -> (i32, i32) {
    %c0_i32 = arith.constant 0 : i32
    %c0_i32_0 = arith.constant 0 : i32
    %c0_i32_1 = arith.constant 0 : i32
    return %c0_i32, %c0_i32_0 : i32, i32
  }
  func.func @transform_2(%arg0: i32) -> (i32, i32) {
    %c0_i32 = arith.constant 0 : i32
    %c0_i32_0 = arith.constant 0 : i32
    %c0_i32_1 = arith.constant 0 : i32
    return %c0_i32, %c0_i32_0 : i32, i32
  }
  func.func @transform_3(%arg0: i32) -> (i32, i32) {
    %c0_i32 = arith.constant 0 : i32
    %c0_i32_0 = arith.constant 0 : i32
    return %c0_i32, %arg0 : i32, i32
  }
}

</mosaic_0001>

<llo_original>
// kernel: tpu_custom_call.1
$region0: #{tpu_custom_call.1}
  #allocation0 [shape = 'u32[]', space=smem, size = 0x4, offset = 0x4, fixed_abs, tag = 'smem constant byte address 0x4 - core index']
  #allocation1 [shape = 'u32[72,128]{1,0:T(1,128)}', space=vmem, size = 0x9000, scoped, tag = 'internal scratch']
  #allocation2 [shape = 'f32[1,1]{1,0:T(1,128)S(6)}', space=smem, size = 0x200, scoped, tag = 'scoped memory for tpu_custom_call.1']
  %s0 = inlined_call_operand.hbm [shape: f32[8,32], index: 0, kind: input, shape index: {}]
  %s1 = inlined_call_operand.vmem [shape: f32[1,32], index: 1, kind: input, shape index: {}]
  %s2 = inlined_call_operand.<no memory space> [shape: f32[1,1], index: 2, kind: input, shape index: {}]
  %s3 = inlined_call_operand.hbm [shape: f32[1,8], index: 3, kind: output, shape index: {}]
  %s4 = sld [smem:[#allocation0]]
  $region26: #{tpu_custom_call.1} parent=0
    _
  %s6 = ssub.s32 1, %s4
  %s7 = scalar_select 0, %s6, %s4
  %8 = sst [smem:[#allocation2]] %s2
  $region1: #{tpu_custom_call.1} parent=0
    #allocation3 [shape = 'u8[4096]{0}', space=vmem, size = 0x1000, scoped, tag = 'input window, operand 0, single buffered']
    #allocation4 [shape = 's32[1]{0}', space=sflag, size = 0x4, scoped, tag = 'scoped memory for tpu_custom_call.1']
    #allocation5 [shape = 's32[1]{0}', space=sflag, size = 0x4, scoped, tag = 'scoped memory for tpu_custom_call.1']
    #allocation6 [shape = 'u8[512]{0}', space=vmem, size = 0x400, scoped, tag = 'output window, operand 0, single buffered']
    %9 = vsyncpa [#allocation4], 0
    %10 = vsyncpa [#allocation5], 0
    // Predicated region
    $region2: #{tpu_custom_call.1} parent=1 // pred_check
      _
    $region3: #{tpu_custom_call.1} parent=1 // pred_check_branch
      %12 = sbr.rel (0) target = $region5
    $region4: #{tpu_custom_call.1} parent=1 // pred_region
      %14 = vsyncadd [#allocation4], 0
      %s16 = sshll.u32 %s0, 4
      %s17 = int_to_ptr.hbm [resolvable:$true] %s16
      %s18 = sshll.u32 [#allocation3], 4
      %s19 = int_to_ptr.vmem [resolvable:$true] %s18
      %21 = dma.hbm_to_vmem [thread:$0]  %s17, 128, %s19, [#allocation4]
    $region5: #{tpu_custom_call.1} parent=1 // pred_fallthru
      _
    // Predicated region
    $region6: #{tpu_custom_call.1} parent=1 // pred_check
      _
    $region7: #{tpu_custom_call.1} parent=1 // pred_check_branch
      %23 = sbr.rel (0) target = $region9
    $region8: #{tpu_custom_call.1} parent=1 // pred_region
      _
    $region9: #{tpu_custom_call.1} parent=1 // pred_fallthru
      _
    // Predicated region
    $region10: #{tpu_custom_call.1} parent=1 // pred_check
      _
    $region11: #{tpu_custom_call.1} parent=1 // pred_check_branch
      %25 = sbr.rel (0) target = $region13
    $region12: #{tpu_custom_call.1} parent=1 // pred_region
      _
    $region13: #{tpu_custom_call.1} parent=1 // pred_fallthru
      _
    // Predicated region
    $region14: #{tpu_custom_call.1} parent=1 // pred_check
      _
    $region15: #{tpu_custom_call.1} parent=1 // pred_check_branch
      %27 = sbr.rel (0) target = $region17
    $region16: #{tpu_custom_call.1} parent=1 // pred_region
      %29 = dma.done [#allocation4], 128
    $region17: #{tpu_custom_call.1} parent=1 // pred_fallthru
      _
    %v30 = vld [vmem:[%s1] sm:$0x1]
    %v31 = vld [vmem:[#allocation3] sm:$0xff]
    %s32 = sld [smem:[#allocation2]]
    %v33 = vstv %s32
    %vm34 = vcmask 261120
    %v36 = vsel %vm34, %v30, 0
    %v39 = vsel %vm34, %v31, 0
    %41 = vmatpush.xpose.msra.mxu0 0.0
    %42 = vmatpush.xpose.msra.mxu0 0.0
    %43 = vmatpush.xpose.msra.mxu0 0.0
    %44 = vmatpush.xpose.msra.mxu0 0.0
    %45 = vmatpush.xpose.msra.mxu0 0.0
    %46 = vmatpush.xpose.msra.mxu0 0.0
    %47 = vmatpush.xpose.msra.mxu0 0.0
    %48 = vmatpush.xpose.msra.mxu0 0.0
    %49 = vmatpush.xpose.msra.mxu0 0.0
    %50 = vmatpush.xpose.msra.mxu0 0.0
    %51 = vmatpush.xpose.msra.mxu0 0.0
    %52 = vmatpush.xpose.msra.mxu0 0.0
    %53 = vmatpush.xpose.msra.mxu0 0.0
    %54 = vmatpush.xpose.msra.mxu0 0.0
    %55 = vmatpush.xpose.msra.mxu0 0.0
    %56 = vmatpush.xpose.msra.mxu0 %v39
    %57 = vmatmul.f32.gmra.mxu0 %v36
    %v58 = vpop.f32.mrf.mxu0
    %v59 = vadd.f32 %v33, %v58
    %60 = vdwg.mxu0
    %v61 = vxor.u32 %v59, 2147483648
    %v62 = vmul.f32 %v61, 1.442695
    %v63 = vpow.pop %v62
    %v64 = vadd.f32 %v63, 1.0
    %v65 = vrcp.pop %v64
    %v66 = vmul.f32 %v64, %v65
    %v67 = vsub.f32 1.0, %v66
    %v68 = vmul.f32 %v65, %v67
    %v69 = vadd.f32 %v65, %v68
    %vm70 = vweird.f32 %v64
    %vm71 = vweird.f32 %v65
    %vm72 = vmor %vm70, %vm71
    %v73 = vsel %vm72, %v65, %v69
    %v74 = vand.u32 2147483647, %v64
    %vm75 = vcmp.eq.f32.partialorder %v74, 8.507059e+37
    %v76 = vand.u32 %v64, 2147483648
    %v77 = vor.u32 1.1754944e-38, %v76
    %v78 = vsel %vm75, %v77, %v73
    %v79 = vmul.f32 1.0, %v78
    %vm80 = vcmask 57344
    %81 = vst.msk [vmem:[#allocation6] sm:$0x1] %vm80, %v79
    // Predicated region
    $region18: #{tpu_custom_call.1} parent=1 // pred_check
      _
    $region19: #{tpu_custom_call.1} parent=1 // pred_check_branch
      %83 = sbr.rel (0) target = $region21
    $region20: #{tpu_custom_call.1} parent=1 // pred_region
      %85 = vsyncadd [#allocation5], 0
      %s87 = sshll.u32 [#allocation6], 4
      %s88 = int_to_ptr.vmem [resolvable:$true] %s87
      %s89 = sshll.u32 %s3, 4
      %s90 = int_to_ptr.hbm [resolvable:$true] %s89
      %92 = dma.vmem_to_hbm [thread:$0]  %s88, 16, %s90, [#allocation5]
    $region21: #{tpu_custom_call.1} parent=1 // pred_fallthru
      _
    // Predicated region
    $region22: #{tpu_custom_call.1} parent=1 // pred_check
      _
    $region23: #{tpu_custom_call.1} parent=1 // pred_check_branch
      %94 = sbr.rel (0) target = $region25
    $region24: #{tpu_custom_call.1} parent=1 // pred_region
      %96 = dma.done [#allocation5], 16
    $region25: #{tpu_custom_call.1} parent=1 // pred_fallthru
      _
    %97 = vsyncpa [#allocation4], 1
    %98 = vsyncpa [#allocation5], 1

</llo_original>
